<compile_context>
chip_gen: v7x
topology: tpu7x:2x2x1
jax: 0.10.0
libtpu: 0.0.40
codegen_flags: <defaults>
</compile_context>

<pallas_src>
import jax
import jax.numpy as jnp
import numpy as np
from jax.experimental import pallas as pl
from jax.experimental.pallas import tpu as pltpu


def residual_layer_kernel(x_ref, w1c_ref, b1_ref, w2_ref, b2_ref, o_ref):
    """Fused ResidualLayer forward for one block of TN batch rows.

    Admissible shapes (enforced by the wrapper, same as PyTorch): H = W = 1 and
    Cin broadcastable to Ch.  Consequences used here:
      * 3x3 conv with padding=1 on a 1x1 map: only the centre tap ever sees
        data, so the conv is exactly relu(x) @ w1[1,1]  (one MXU op).
      * 1x1 conv with padding=1: its output ring sees only zero activations,
        i.e. ring = b2; only the centre spatial position carries the real conv.

    x_ref  : (TN, Cin)   raw input rows (conv input AND residual), native dtype
    w1c_ref: (Cin, Cres) centre tap of the 3x3 conv weight
    b1_ref : (1, Cres)
    w2_ref : (Cres, Ch)  1x1 conv weight
    b2_ref : (1, Ch)
    o_ref  : (9, TN, Ch) output, spatial position (row-major over 3x3) leading,
                         channels lane-dense at offset 0
    """
    x = x_ref[...].astype(jnp.float32)                       # (TN, Cin)

    # ReLU #1 -> 3x3 conv (centre tap only) -> +b1 -> ReLU #2.
    y = jnp.dot(jnp.maximum(x, 0.0), w1c_ref[...].astype(jnp.float32),
                preferred_element_type=jnp.float32) + b1_ref[...].astype(jnp.float32)
    y = jnp.maximum(y, 0.0)                                   # (TN, Cres)

    # 1x1 conv on the single interior spatial position.
    b2 = b2_ref[...].astype(jnp.float32)                      # (1, Ch)
    z = jnp.dot(y, w2_ref[...].astype(jnp.float32),
                preferred_element_type=jnp.float32) + b2      # (TN, Ch)

    # Residual add = PyTorch's in-place broadcast `output += input`:
    # x (TN, Cin) broadcasts over channels (Cin == Ch or Cin == 1) and positions.
    border = (b2 + x).astype(o_ref.dtype)                     # padding ring of the 1x1 conv
    centre = (z + x).astype(o_ref.dtype)                      # spatial position (1, 1)

    # Lane-dense epilogue: one broadcasted store covers the 8 identical ring
    # positions (and the centre slot), then position 4 is overwritten.
    o_ref[...] = jnp.broadcast_to(border[None], o_ref.shape)
    o_ref[4] = centre


def _round_up(x, m):
    return ((x + m - 1) // m) * m


def _vmem_budget_bytes():
    """Per-grid-step VMEM budget (covers double-buffered blocks + temporaries)."""
    try:
        kind = jax.devices()[0].device_kind.lower()
    except Exception:
        kind = ""
    if "v7" in kind or not kind:
        return 24 * 1024 * 1024      # v7x: 64 MiB physical VMEM per TensorCore
    return 48 * 1024 * 1024          # v2-v6: 128 MiB VMEM -> go bigger


def _choose_batch_tile(n, cin, cres, ch, in_itemsize, out_itemsize, budget):
    """Biggest batch tile that fits the VMEM budget; >= 2 grid steps when possible."""
    per_row = (2 * cin * in_itemsize             # double-buffered input block
               + 2 * 9 * ch * out_itemsize       # double-buffered output block
               + 4 * (2 * cin + cres + 3 * ch))  # f32 in-kernel temporaries
    tn_cap = min(max(8, budget // per_row), 4096)
    if n <= tn_cap:
        if n >= 16:
            # At least two grid steps so both v7x TensorCores get work
            # (harmless on single-core v5e/v6e); keep the tile 8-row aligned.
            return min(_round_up(-(-n // 2), 8), n)
        return n                     # tiny batch: block dim == full dim is always legal
    return max(8, (tn_cap // 8) * 8)


def residual_layer_forward(x_nchw, w1_hwio, b1, w2_io, b2, *, output_layout="NCHW"):
    """ResidualLayer forward.

    x_nchw : (N, Cin, H, W) like PyTorch (the module only admits H == W == 1)
    w1_hwio: (3, 3, Cin, Cres) first conv weight, HWIO
    b1     : (Cres,)
    w2_io  : (Cres, Ch) second (1x1) conv weight
    b2     : (Ch,)
    output_layout: "NCHW" (PyTorch-identical, default), "NHWC", or "P_NC"
        (raw (Ho*Wo, N, Ch) kernel layout: skips the extra HBM transpose pass).
    """
    N, Cin, H, W = x_nchw.shape
    Cres = w1_hwio.shape[3]
    Ch = w2_io.shape[1]
    Ho, Wo = H + 2, W + 2

    # Mirror PyTorch's in-place `output += input` validity: the input must
    # broadcast against the (N, Ch, H+2, W+2) res_block output (the 1x1 conv
    # uses padding=1, so spatial grows by 2).  Forces H == W == 1, Cin in {1, Ch}.
    for xd, od in zip((N, Cin, H, W), (N, Ch, Ho, Wo)):
        if xd != od and xd != 1:
            raise ValueError(
                "residual add: input shape {} does not broadcast against the "
                "res_block output shape {}".format((N, Cin, H, W), (N, Ch, Ho, Wo)))

    out_dtype = jnp.result_type(x_nchw.dtype, w1_hwio.dtype, b1.dtype,
                                w2_io.dtype, b2.dtype)
    in_itemsize = jnp.dtype(x_nchw.dtype).itemsize
    out_itemsize = jnp.dtype(out_dtype).itemsize

    # H == W == 1, so NCHW <-> (N, Cin) is a pure reshape (no data movement);
    # the input keeps its native dtype (no extra f32 upcast pass over HBM).
    x2 = x_nchw.reshape(N, Cin)
    # Only the centre tap of the padded 3x3 conv ever touches data on a 1x1
    # map, so only w1[1, 1] is shipped to the kernel (9x less weight traffic).
    w1c = w1_hwio[1, 1]                        # (Cin, Cres)
    b1_2 = b1.reshape(1, Cres)
    b2_2 = b2.reshape(1, Ch)

    budget = _vmem_budget_bytes()
    TN = _choose_batch_tile(N, Cin, Cres, Ch, in_itemsize, out_itemsize, budget)
    grid = (pl.cdiv(N, TN),)

    flops = 2 * N * Cin * Cres + 2 * N * Cres * Ch
    param_bytes = (w1c.size * jnp.dtype(w1c.dtype).itemsize
                   + b1.size * jnp.dtype(b1.dtype).itemsize
                   + w2_io.size * jnp.dtype(w2_io.dtype).itemsize
                   + b2.size * jnp.dtype(b2.dtype).itemsize)
    bytes_accessed = (N * Cin * in_itemsize + param_bytes
                      + Ho * Wo * N * Ch * out_itemsize)

    out_pnc = pl.pallas_call(
        residual_layer_kernel,
        out_shape=jax.ShapeDtypeStruct((Ho * Wo, N, Ch), out_dtype),
        grid=grid,
        in_specs=[
            pl.BlockSpec((TN, Cin), lambda n: (n, 0)),
            pl.BlockSpec((Cin, Cres), lambda n: (0, 0)),
            pl.BlockSpec((1, Cres), lambda n: (0, 0)),
            pl.BlockSpec((Cres, Ch), lambda n: (0, 0)),
            pl.BlockSpec((1, Ch), lambda n: (0, 0)),
        ],
        out_specs=pl.BlockSpec((Ho * Wo, TN, Ch), lambda n: (0, n, 0)),
        compiler_params=pltpu.CompilerParams(
            dimension_semantics=("parallel",),
            vmem_limit_bytes=int(min(budget + 8 * 1024 * 1024, 64 * 1024 * 1024)),
        ),
        cost_estimate=pl.CostEstimate(flops=flops, transcendentals=0,
                                      bytes_accessed=bytes_accessed),
    )(x2, w1c, b1_2, w2_io, b2_2)

    if output_layout == "P_NC":
        return out_pnc                                     # (Ho*Wo, N, Ch), no extra pass
    hw_n_c = out_pnc.reshape(Ho, Wo, N, Ch)
    if output_layout == "NHWC":
        return jnp.transpose(hw_n_c, (2, 0, 1, 3))         # (N, Ho, Wo, Ch)
    return jnp.transpose(hw_n_c, (2, 3, 0, 1))             # (N, Ch, Ho, Wo) == PyTorch


def residual_layer_reference(x_nchw, w1_hwio, b1, w2_io, b2):
    """Pure-JAX reference (lax.conv) with identical semantics, for verification."""
    out_dtype = jnp.result_type(x_nchw.dtype, w1_hwio.dtype, b1.dtype,
                                w2_io.dtype, b2.dtype)
    x = jnp.transpose(x_nchw, (0, 2, 3, 1)).astype(jnp.float32)
    a = jnp.maximum(x, 0.0)
    y = jax.lax.conv_general_dilated(
        a, w1_hwio.astype(jnp.float32), (1, 1), ((1, 1), (1, 1)),
        dimension_numbers=("NHWC", "HWIO", "NHWC")) + b1.astype(jnp.float32)
    y = jnp.maximum(y, 0.0)
    z = jax.lax.conv_general_dilated(
        y, w2_io.astype(jnp.float32).reshape(1, 1, *w2_io.shape), (1, 1), ((1, 1), (1, 1)),
        dimension_numbers=("NHWC", "HWIO", "NHWC")) + b2.astype(jnp.float32)
    out = z + x                                            # same broadcast as torch
    return jnp.transpose(out, (0, 3, 1, 2)).astype(out_dtype)


if __name__ == "__main__":
    # Shapes the module's forward actually admits: spatial 1x1 (padding=1 on the
    # 1x1 conv grows spatial dims by 2), in_dim broadcastable to h_dim.
    key = jax.random.PRNGKey(0)
    kx, kw1, kb1, kw2, kb2, kx1, kw1b, kx2 = jax.random.split(key, 8)

    N, in_dim, h_dim, res_h_dim = 4, 4, 4, 8
    H = W = 1
    x = jax.random.normal(kx, (N, in_dim, H, W), dtype=jnp.float32)          # NCHW like PyTorch
    w1 = jax.random.uniform(kw1, (3, 3, in_dim, res_h_dim), minval=-0.3, maxval=0.3,
                            dtype=jnp.float32)                               # HWIO
    b1 = jax.random.uniform(kb1, (res_h_dim,), minval=-0.1, maxval=0.1, dtype=jnp.float32)
    w2 = jax.random.uniform(kw2, (res_h_dim, h_dim), minval=-0.3, maxval=0.3, dtype=jnp.float32)
    b2 = jax.random.uniform(kb2, (h_dim,), minval=-0.1, maxval=0.1, dtype=jnp.float32)

    out = jax.block_until_ready(residual_layer_forward(x, w1, b1, w2, b2))
    ref = jax.block_until_ready(residual_layer_reference(x, w1, b1, w2, b2))
    assert out.shape == (N, h_dim, H + 2, W + 2), out.shape
    if not np.allclose(np.asarray(out), np.asarray(ref), rtol=5e-3, atol=5e-3):
        raise AssertionError("Pallas kernel does not match JAX reference (main case)")

    # Transpose-free NHWC fast path must carry the same values.
    out_nhwc = jax.block_until_ready(
        residual_layer_forward(x, w1, b1, w2, b2, output_layout="NHWC"))
    if not np.allclose(np.asarray(jnp.transpose(out_nhwc, (0, 3, 1, 2))),
                       np.asarray(ref), rtol=5e-3, atol=5e-3):
        raise AssertionError("Pallas kernel NHWC layout does not match reference")

    # Channel-broadcast case PyTorch also admits: in_dim == 1 (broadcast over Ch).
    x1 = jax.random.normal(kx1, (N, 1, H, W), dtype=jnp.float32)
    w1b = jax.random.uniform(kw1b, (3, 3, 1, res_h_dim), minval=-0.3, maxval=0.3,
                             dtype=jnp.float32)
    out1 = jax.block_until_ready(residual_layer_forward(x1, w1b, b1, w2, b2))
    ref1 = jax.block_until_ready(residual_layer_reference(x1, w1b, b1, w2, b2))
    if not np.allclose(np.asarray(out1), np.asarray(ref1), rtol=5e-3, atol=5e-3):
        raise AssertionError("Pallas kernel does not match JAX reference (Cin=1 broadcast)")

    # Larger batch in bf16: exercises the multi-step batch grid (>= 2 tiles for
    # v7x megacore) and the native-dtype (non-f32) I/O path.
    Nb = 32
    xb = jax.random.normal(kx2, (Nb, in_dim, H, W), dtype=jnp.float32).astype(jnp.bfloat16)
    w1_bf, b1_bf = w1.astype(jnp.bfloat16), b1.astype(jnp.bfloat16)
    w2_bf, b2_bf = w2.astype(jnp.bfloat16), b2.astype(jnp.bfloat16)
    outb = jax.block_until_ready(residual_layer_forward(xb, w1_bf, b1_bf, w2_bf, b2_bf))
    refb = jax.block_until_ready(residual_layer_reference(xb, w1_bf, b1_bf, w2_bf, b2_bf))
    assert outb.dtype == jnp.bfloat16, outb.dtype
    if not np.allclose(np.asarray(outb, dtype=np.float32),
                       np.asarray(refb, dtype=np.float32), rtol=3e-2, atol=3e-2):
        raise AssertionError("Pallas kernel does not match JAX reference (bf16, multi-tile)")

    print("KERNEL_OK")
</pallas_src>

<mosaic_0001>
module attributes {stable_mosaic.version = 11 : i64} {
  func.func @residual_layer_kernel(%arg0: i32, %arg1: memref<4x4xf32, #tpu.memory_space<vmem>>, %arg2: memref<4x8xf32, #tpu.memory_space<vmem>>, %arg3: memref<1x8xf32, #tpu.memory_space<vmem>>, %arg4: memref<8x4xf32, #tpu.memory_space<vmem>>, %arg5: memref<1x4xf32, #tpu.memory_space<vmem>>, %arg6: memref<9x4x4xf32, #tpu.memory_space<vmem>>) attributes {dimension_semantics = [#tpu.dimension_semantics<parallel>], iteration_bounds = array<i64: 1>, scalar_prefetch = 0 : i64, scratch_operands = 0 : i64, tpu.core_type = #tpu.core_type<tc>, window_params = [{transform_indices = @transform_0, window_bounds = array<i64: 4, 4>}, {pipeline_mode = #tpu.pipeline_mode<synchronous>, transform_indices = @transform_1, window_bounds = array<i64: 4, 8>}, {pipeline_mode = #tpu.pipeline_mode<synchronous>, transform_indices = @transform_2, window_bounds = array<i64: 1, 8>}, {pipeline_mode = #tpu.pipeline_mode<synchronous>, transform_indices = @transform_3, window_bounds = array<i64: 8, 4>}, {pipeline_mode = #tpu.pipeline_mode<synchronous>, transform_indices = @transform_4, window_bounds = array<i64: 1, 4>}, {transform_indices = @transform_5, window_bounds = array<i64: 9, 4, 4>}]} {
    %c0 = arith.constant 0 : index
    %c0_0 = arith.constant 0 : index
    %0 = vector.load %arg1[%c0, %c0_0] : memref<4x4xf32, #tpu.memory_space<vmem>>, vector<4x4xf32>
    %cst = arith.constant 0.000000e+00 : f32
    %1 = vector.broadcast %cst : f32 to vector<4x4xf32>
    %2 = arith.maximumf %0, %1 : vector<4x4xf32>
    %c0_1 = arith.constant 0 : index
    %c0_2 = arith.constant 0 : index
    %3 = vector.load %arg2[%c0_1, %c0_2] : memref<4x8xf32, #tpu.memory_space<vmem>>, vector<4x8xf32>
    %cst_3 = arith.constant dense<0.000000e+00> : vector<4x8xf32>
    %4 = tpu.matmul %2, %3, %cst_3 {dimension_numbers = #tpu.dot_dimension_numbers<[1], [0], [0], [1], [0, 0, 1, 1], [], []>} : vector<4x4xf32>, vector<4x8xf32>, vector<4x8xf32> -> vector<4x8xf32>
    %c0_4 = arith.constant 0 : index
    %c0_5 = arith.constant 0 : index
    %5 = vector.load %arg3[%c0_4, %c0_5] : memref<1x8xf32, #tpu.memory_space<vmem>>, vector<1x8xf32>
    %6 = vector.broadcast %5 : vector<1x8xf32> to vector<4x8xf32>
    %7 = arith.addf %4, %6 : vector<4x8xf32>
    %cst_6 = arith.constant 0.000000e+00 : f32
    %8 = vector.broadcast %cst_6 : f32 to vector<4x8xf32>
    %9 = arith.maximumf %7, %8 : vector<4x8xf32>
    %c0_7 = arith.constant 0 : index
    %c0_8 = arith.constant 0 : index
    %10 = vector.load %arg5[%c0_7, %c0_8] : memref<1x4xf32, #tpu.memory_space<vmem>>, vector<1x4xf32>
    %c0_9 = arith.constant 0 : index
    %c0_10 = arith.constant 0 : index
    %11 = vector.load %arg4[%c0_9, %c0_10] : memref<8x4xf32, #tpu.memory_space<vmem>>, vector<8x4xf32>
    %cst_11 = arith.constant dense<0.000000e+00> : vector<4x4xf32>
    %12 = tpu.matmul %9, %11, %cst_11 {dimension_numbers = #tpu.dot_dimension_numbers<[1], [0], [0], [1], [0, 0, 1, 1], [], []>} : vector<4x8xf32>, vector<8x4xf32>, vector<4x4xf32> -> vector<4x4xf32>
    %13 = vector.broadcast %10 : vector<1x4xf32> to vector<4x4xf32>
    %14 = arith.addf %12, %13 : vector<4x4xf32>
    %15 = vector.broadcast %10 : vector<1x4xf32> to vector<4x4xf32>
    %16 = arith.addf %15, %0 : vector<4x4xf32>
    %17 = arith.addf %14, %0 : vector<4x4xf32>
    %18 = vector.shape_cast %16 : vector<4x4xf32> to vector<1x4x4xf32>
    %19 = vector.shape_cast %18 : vector<1x4x4xf32> to vector<1x4x4xf32>
    %20 = vector.broadcast %19 : vector<1x4x4xf32> to vector<9x4x4xf32>
    %c0_12 = arith.constant 0 : index
    %c0_13 = arith.constant 0 : index
    %c0_14 = arith.constant 0 : index
    %21 = vector.load %arg6[%c0_12, %c0_13, %c0_14] : memref<9x4x4xf32, #tpu.memory_space<vmem>>, vector<9x4x4xf32>
    tpu.vector_store %arg6[%c0_12, %c0_13, %c0_14], %20 {strides = array<i32>} : memref<9x4x4xf32, #tpu.memory_space<vmem>>, vector<9x4x4xf32>,
    %c4 = arith.constant 4 : index
    %c0_15 = arith.constant 0 : index
    %c0_16 = arith.constant 0 : index
    %22 = vector.load %arg6[%c4, %c0_15, %c0_16] : memref<9x4x4xf32, #tpu.memory_space<vmem>>, vector<1x4x4xf32>
    %23 = vector.shape_cast %22 : vector<1x4x4xf32> to vector<4x4xf32>
    %24 = vector.shape_cast %17 : vector<4x4xf32> to vector<1x4x4xf32>
    tpu.vector_store %arg6[%c4, %c0_15, %c0_16], %24 {strides = array<i32>} : memref<9x4x4xf32, #tpu.memory_space<vmem>>, vector<1x4x4xf32>,
    return
  }
  func.func @transform_0(%arg0: i32) -> (i32, i32) {
    %c0_i32 = arith.constant 0 : i32
    %c0_i32_0 = arith.constant 0 : i32
    return %arg0, %c0_i32 : i32, i32
  }
  func.func @transform_1(%arg0: i32) -> (i32, i32) {
    %c0_i32 = arith.constant 0 : i32
    %c0_i32_0 = arith.constant 0 : i32
    %c0_i32_1 = arith.constant 0 : i32
    return %c0_i32, %c0_i32_0 : i32, i32
  }
  func.func @transform_2(%arg0: i32) -> (i32, i32) {
    %c0_i32 = arith.constant 0 : i32
    %c0_i32_0 = arith.constant 0 : i32
    %c0_i32_1 = arith.constant 0 : i32
    return %c0_i32, %c0_i32_0 : i32, i32
  }
  func.func @transform_3(%arg0: i32) -> (i32, i32) {
    %c0_i32 = arith.constant 0 : i32
    %c0_i32_0 = arith.constant 0 : i32
    %c0_i32_1 = arith.constant 0 : i32
    return %c0_i32, %c0_i32_0 : i32, i32
  }
  func.func @transform_4(%arg0: i32) -> (i32, i32) {
    %c0_i32 = arith.constant 0 : i32
    %c0_i32_0 = arith.constant 0 : i32
    %c0_i32_1 = arith.constant 0 : i32
    return %c0_i32, %c0_i32_0 : i32, i32
  }
  func.func @transform_5(%arg0: i32) -> (i32, i32, i32) {
    %c0_i32 = arith.constant 0 : i32
    %c0_i32_0 = arith.constant 0 : i32
    %c0_i32_1 = arith.constant 0 : i32
    return %c0_i32, %arg0, %c0_i32_0 : i32, i32, i32
  }
}

</mosaic_0001>

<llo_original>
// kernel: tpu_custom_call.1
$region0: #{tpu_custom_call.1}
  #allocation0 [shape = 'u32[]', space=smem, size = 0x4, offset = 0x4, fixed_abs, tag = 'smem constant byte address 0x4 - core index']
  #allocation1 [shape = 'u32[144,128]{1,0:T(1,128)}', space=vmem, size = 0x12000, scoped, tag = 'internal scratch']
  %s0 = inlined_call_operand.vmem [shape: f32[4,4], index: 0, kind: input, shape index: {}]
  %s1 = inlined_call_operand.vmem [shape: f32[4,8], index: 1, kind: input, shape index: {}]
  %s2 = inlined_call_operand.vmem [shape: f32[1,8], index: 2, kind: input, shape index: {}]
  %s3 = inlined_call_operand.vmem [shape: f32[8,4], index: 3, kind: input, shape index: {}]
  %s4 = inlined_call_operand.vmem [shape: f32[1,4], index: 4, kind: input, shape index: {}]
  %s5 = inlined_call_operand.vmem [shape: f32[9,4,4], index: 5, kind: output, shape index: {}]
  %s6 = sld [smem:[#allocation0]]
  $region30: #{tpu_custom_call.1} parent=0
    _
  %s8 = ssub.s32 1, %s6
  %s9 = scalar_select 0, %s8, %s6
  // Predicated region
  $region2: #{tpu_custom_call.1} parent=0 // pred_check
    _
  $region3: #{tpu_custom_call.1} parent=0 // pred_check_branch
    %11 = sbr.rel (0) target = $region5
  $region4: #{tpu_custom_call.1} parent=0 // pred_region
    _
  $region5: #{tpu_custom_call.1} parent=0 // pred_fallthru
    _
  // Predicated region
  $region6: #{tpu_custom_call.1} parent=0 // pred_check
    _
  $region7: #{tpu_custom_call.1} parent=0 // pred_check_branch
    %13 = sbr.rel (0) target = $region9
  $region8: #{tpu_custom_call.1} parent=0 // pred_region
    _
  $region9: #{tpu_custom_call.1} parent=0 // pred_fallthru
    _
  // Predicated region
  $region10: #{tpu_custom_call.1} parent=0 // pred_check
    _
  $region11: #{tpu_custom_call.1} parent=0 // pred_check_branch
    %15 = sbr.rel (0) target = $region13
  $region12: #{tpu_custom_call.1} parent=0 // pred_region
    _
  $region13: #{tpu_custom_call.1} parent=0 // pred_fallthru
    _
  // Predicated region
  $region14: #{tpu_custom_call.1} parent=0 // pred_check
    _
  $region15: #{tpu_custom_call.1} parent=0 // pred_check_branch
    %17 = sbr.rel (0) target = $region17
  $region16: #{tpu_custom_call.1} parent=0 // pred_region
    _
  $region17: #{tpu_custom_call.1} parent=0 // pred_fallthru
    _
  // Predicated region
  $region18: #{tpu_custom_call.1} parent=0 // pred_check
    _
  $region19: #{tpu_custom_call.1} parent=0 // pred_check_branch
    %19 = sbr.rel (0) target = $region21
  $region20: #{tpu_custom_call.1} parent=0 // pred_region
    _
  $region21: #{tpu_custom_call.1} parent=0 // pred_fallthru
    _
  %v20 = vld [vmem:[%s0] sm:$0xf]
  %v21 = vmax.f32 %v20, 0.0
  %v22 = vld [vmem:[%s1] sm:$0xf]
  %v23 = vld [vmem:[%s2] sm:$0x1]
  %v25 = vlaneseq
  %v26 = vshrl.u32 %v25, 7
  %v27 = vsub.s32 0, %v26
  %v28 = vrot.slane %v23, %v27
  %vm30 = vcmask 31744
  %v32 = vsel %vm30, %v21, 0
  %vm34 = vcmask 1043456
  %v36 = vsel %vm34, %v22, 0
  %38 = vmatprep.subr.mxu0 0.0
  %39 = vmatpush1.msra.mxu0 %v36
  %40 = vmatprep.subr.mxu0 0.0
  %41 = vmatpush1.msra.mxu0 0.0
  %42 = vmatprep.subr.mxu0 0.0
  %43 = vmatpush1.msra.mxu0 0.0
  %44 = vmatprep.subr.mxu0 0.0
  %45 = vmatpush1.msra.mxu0 0.0
  %46 = vmatprep.subr.mxu0 0.0
  %47 = vmatpush1.msra.mxu0 0.0
  %48 = vmatprep.subr.mxu0 0.0
  %49 = vmatpush1.msra.mxu0 0.0
  %50 = vmatprep.subr.mxu0 0.0
  %51 = vmatpush1.msra.mxu0 0.0
  %52 = vmatprep.subr.mxu0 0.0
  %53 = vmatpush1.msra.mxu0 0.0
  %54 = vmatprep.subr.mxu0 0.0
  %55 = vmatpush1.msra.mxu0 0.0
  %56 = vmatprep.subr.mxu0 0.0
  %57 = vmatpush1.msra.mxu0 0.0
  %58 = vmatprep.subr.mxu0 0.0
  %59 = vmatpush1.msra.mxu0 0.0
  %60 = vmatprep.subr.mxu0 0.0
  %61 = vmatpush1.msra.mxu0 0.0
  %62 = vmatprep.subr.mxu0 0.0
  %63 = vmatpush1.msra.mxu0 0.0
  %64 = vmatprep.subr.mxu0 0.0
  %65 = vmatpush1.msra.mxu0 0.0
  %66 = vmatprep.subr.mxu0 0.0
  %67 = vmatpush1.msra.mxu0 0.0
  %68 = vmatprep.subr.mxu0 0.0
  %69 = vmatpush1.msra.mxu0 0.0
  %70 = vmatprep.subr.mxu0 0.0
  %71 = vmatpush1.msra.mxu0 0.0
  %72 = vmatprep.subr.mxu0 0.0
  %73 = vmatpush1.msra.mxu0 0.0
  %74 = vmatprep.subr.mxu0 0.0
  %75 = vmatpush1.msra.mxu0 0.0
  %76 = vmatprep.subr.mxu0 0.0
  %77 = vmatpush1.msra.mxu0 0.0
  %78 = vmatprep.subr.mxu0 0.0
  %79 = vmatpush1.msra.mxu0 0.0
  %80 = vmatprep.subr.mxu0 0.0
  %81 = vmatpush1.msra.mxu0 0.0
  %82 = vmatprep.subr.mxu0 0.0
  %83 = vmatpush1.msra.mxu0 0.0
  %84 = vmatprep.subr.mxu0 0.0
  %85 = vmatpush1.msra.mxu0 0.0
  %86 = vmatprep.subr.mxu0 0.0
  %87 = vmatpush1.msra.mxu0 0.0
  %88 = vmatprep.subr.mxu0 0.0
  %89 = vmatpush1.msra.mxu0 0.0
  %90 = vmatprep.subr.mxu0 0.0
  %91 = vmatpush1.msra.mxu0 0.0
  %92 = vmatprep.subr.mxu0 0.0
  %93 = vmatpush1.msra.mxu0 0.0
  %94 = vmatprep.subr.mxu0 0.0
  %95 = vmatpush1.msra.mxu0 0.0
  %96 = vmatprep.subr.mxu0 0.0
  %97 = vmatpush1.msra.mxu0 0.0
  %98 = vmatprep.subr.mxu0 0.0
  %99 = vmatpush1.msra.mxu0 0.0
  %100 = vmatprep.subr.mxu0 0.0
  %101 = vmatpush1.msra.mxu0 0.0
  %102 = vmatprep.mubr.f32.mxu0 0.0
  %103 = vmatmul.mubr.f32.gmra.mrb[0].mxu0 %v32
  %v104 = vpop.f32.mrb[0].mxu0
  %v105 = vadd.f32 %v28, %v104
  %v106 = vpop.f32.mrb[0].mxu0
  %107 = vdwg.mxu0
  %v108 = vmax.f32 %v105, 0.0
  %v109 = vld [vmem:[%s4] sm:$0x1]
  %v110 = vld [vmem:[%s3] sm:$0xff]
  %v112 = vlaneseq
  %v113 = vshrl.u32 %v112, 7
  %v114 = vsub.s32 0, %v113
  %v115 = vrot.slane %v109, %v114
  %vm117 = vcmask 64512
  %v119 = vsel %vm117, %v108, 0
  %121 = vmatprep.subr.mxu0 0.0
  %122 = vmatpush1.msra.mxu0 %v110
  %123 = vmatprep.subr.mxu0 0.0
  %124 = vmatpush1.msra.mxu0 0.0
  %125 = vmatprep.subr.mxu0 0.0
  %126 = vmatpush1.msra.mxu0 0.0
  %127 = vmatprep.subr.mxu0 0.0
  %128 = vmatpush1.msra.mxu0 0.0
  %129 = vmatprep.subr.mxu0 0.0
  %130 = vmatpush1.msra.mxu0 0.0
  %131 = vmatprep.subr.mxu0 0.0
  %132 = vmatpush1.msra.mxu0 0.0
  %133 = vmatprep.subr.mxu0 0.0
  %134 = vmatpush1.msra.mxu0 0.0
  %135 = vmatprep.subr.mxu0 0.0
  %136 = vmatpush1.msra.mxu0 0.0
  %137 = vmatprep.subr.mxu0 0.0
  %138 = vmatpush1.msra.mxu0 0.0
  %139 = vmatprep.subr.mxu0 0.0
  %140 = vmatpush1.msra.mxu0 0.0
  %141 = vmatprep.subr.mxu0 0.0
  %142 = vmatpush1.msra.mxu0 0.0
  %143 = vmatprep.subr.mxu0 0.0
  %144 = vmatpush1.msra.mxu0 0.0
  %145 = vmatprep.subr.mxu0 0.0
  %146 = vmatpush1.msra.mxu0 0.0
  %147 = vmatprep.subr.mxu0 0.0
  %148 = vmatpush1.msra.mxu0 0.0
  %149 = vmatprep.subr.mxu0 0.0
  %150 = vmatpush1.msra.mxu0 0.0
  %151 = vmatprep.subr.mxu0 0.0
  %152 = vmatpush1.msra.mxu0 0.0
  %153 = vmatprep.subr.mxu0 0.0
  %154 = vmatpush1.msra.mxu0 0.0
  %155 = vmatprep.subr.mxu0 0.0
  %156 = vmatpush1.msra.mxu0 0.0
  %157 = vmatprep.subr.mxu0 0.0
  %158 = vmatpush1.msra.mxu0 0.0
  %159 = vmatprep.subr.mxu0 0.0
  %160 = vmatpush1.msra.mxu0 0.0
  %161 = vmatprep.subr.mxu0 0.0
  %162 = vmatpush1.msra.mxu0 0.0
  %163 = vmatprep.subr.mxu0 0.0
  %164 = vmatpush1.msra.mxu0 0.0
  %165 = vmatprep.subr.mxu0 0.0
  %166 = vmatpush1.msra.mxu0 0.0
  %167 = vmatprep.subr.mxu0 0.0
  %168 = vmatpush1.msra.mxu0 0.0
  %169 = vmatprep.subr.mxu0 0.0
  %170 = vmatpush1.msra.mxu0 0.0
  %171 = vmatprep.subr.mxu0 0.0
  %172 = vmatpush1.msra.mxu0 0.0
  %173 = vmatprep.subr.mxu0 0.0
  %174 = vmatpush1.msra.mxu0 0.0
  %175 = vmatprep.subr.mxu0 0.0
  %176 = vmatpush1.msra.mxu0 0.0
  %177 = vmatprep.subr.mxu0 0.0
  %178 = vmatpush1.msra.mxu0 0.0
  %179 = vmatprep.subr.mxu0 0.0
  %180 = vmatpush1.msra.mxu0 0.0
  %181 = vmatprep.subr.mxu0 0.0
  %182 = vmatpush1.msra.mxu0 0.0
  %183 = vmatprep.subr.mxu0 0.0
  %184 = vmatpush1.msra.mxu0 0.0
  %185 = vmatprep.mubr.f32.mxu0 0.0
  %186 = vmatmul.mubr.f32.gmra.mrb[0].mxu0 %v119
  %v187 = vpop.f32.mrb[0].mxu0
  %v188 = vadd.f32 %v115, %v187
  %v189 = vpop.f32.mrb[0].mxu0
  %190 = vdwg.mxu0
  %v191 = vadd.f32 %v115, %v20
  %v192 = vadd.f32 %v188, %v20
  %vm193 = vcmask 27648
  %194 = vst.msk [vmem:[%s5] sm:$0xf] %vm193, %v191
  %195 = vst.msk [vmem:[%s5 + $0x4] sm:$0xf] %vm193, %v191
  %196 = vst.msk [vmem:[%s5 + $0x8] sm:$0xf] %vm193, %v191
  %197 = vst.msk [vmem:[%s5 + $0xc] sm:$0xf] %vm193, %v191
  %198 = vst.msk [vmem:[%s5 + $0x10] sm:$0xf] %vm193, %v191
  %199 = vst.msk [vmem:[%s5 + $0x14] sm:$0xf] %vm193, %v191
  %200 = vst.msk [vmem:[%s5 + $0x18] sm:$0xf] %vm193, %v191
  %201 = vst.msk [vmem:[%s5 + $0x1c] sm:$0xf] %vm193, %v191
  %202 = vst.msk [vmem:[%s5 + $0x20] sm:$0xf] %vm193, %v191
  %s203 = scalar_lea.vmem %s5, 16
  %204 = vst.msk [vmem:[%s203] sm:$0xf] %vm193, %v192
  // Predicated region
  $region22: #{tpu_custom_call.1} parent=0 // pred_check
    _
  $region23: #{tpu_custom_call.1} parent=0 // pred_check_branch
    %206 = sbr.rel (0) target = $region25
  $region24: #{tpu_custom_call.1} parent=0 // pred_region
    _
  $region25: #{tpu_custom_call.1} parent=0 // pred_fallthru
    _
  // Predicated region
  $region26: #{tpu_custom_call.1} parent=0 // pred_check
    _
  $region27: #{tpu_custom_call.1} parent=0 // pred_check_branch
    %208 = sbr.rel (0) target = $region29
  $region28: #{tpu_custom_call.1} parent=0 // pred_region
    _
  $region29: #{tpu_custom_call.1} parent=0 // pred_fallthru
    _

</llo_original>
